<compile_context>
chip_gen: v7x
topology: tpu7x:2x2x1
jax: 0.10.0
libtpu: 0.0.40
codegen_flags: <defaults>
</compile_context>

<pallas_src>
import math
import functools

import jax
import jax.numpy as jnp
from jax.experimental import pallas as pl
from jax.experimental.pallas import tpu as pltpu


def _round_up(n, m):
    return ((n + m - 1) // m) * m


def _mlp_kernel(num_hidden, *refs):
    """Fused MLP forward for one batch tile.

    refs layout: (x_ref, w_0, ..., w_{num_hidden-1}, readout_ref, out_ref)

    x arrives as f32 (cast to bf16 in-kernel).  Hidden weights arrive
    pre-transposed to (in_dim, out_dim) with the 1/sqrt(in_dim) MyLinear scale
    folded in; the readout has 1/norm folded in and is zero-padded to a
    lane-dense (multiple-of-128) output width.
    """
    x_ref = refs[0]
    w_refs = refs[1:1 + num_hidden]
    readout_ref = refs[1 + num_hidden]
    out_ref = refs[2 + num_hidden]

    # In-kernel cast: avoids a separate wrapper-side XLA cast op (the kernel is
    # launch/DMA-latency bound at these sizes; one VPU pack here is free).
    h = x_ref[...].astype(jnp.bfloat16)              # (block_b, in_dim) bf16

    for w_ref in w_refs:
        z = jnp.dot(h, w_ref[...], preferred_element_type=jnp.float32)
        # ReLU on the f32 accumulator, then pack to bf16 for the next MXU op.
        h = jnp.maximum(z, 0.0).astype(jnp.bfloat16)

    y = jnp.dot(h, readout_ref[...], preferred_element_type=jnp.float32)
    # Lane-dense (128-multiple) output -> unmasked vst.
    out_ref[...] = y.astype(out_ref.dtype)


def prepare_mlp_params(hidden_weights, readout, norm, dtype=jnp.bfloat16):
    """One-time parameter transform (NOT a per-call wrapper op).

    * transpose PyTorch-style (out_dim, in_dim) hidden weights to (in_dim, out_dim)
    * fold the 1/sqrt(in_dim) MyLinear scale into each hidden weight
      (exact because ReLU is positively homogeneous)
    * fold the 1/norm readout scale into the readout
    * zero-pad the readout's output dim to a multiple of 128 (lane-dense store)
    * cast everything to bf16 for MXU-native matmuls

    Returns (prepped_hidden_weights, prepped_padded_readout, out_dim).
    """
    prepped_ws = []
    for w in hidden_weights:                       # w: (out_dim, in_dim)
        in_dim = w.shape[1]
        prepped_ws.append((w.T * (1.0 / math.sqrt(in_dim))).astype(dtype))

    nn_dim, out_dim = readout.shape
    r = (readout * (1.0 / float(norm))).astype(dtype)
    out_padded = _round_up(out_dim, 128)
    if out_padded != out_dim:
        r = jnp.concatenate(
            [r, jnp.zeros((nn_dim, out_padded - out_dim), dtype=dtype)], axis=1)
    return prepped_ws, r, out_dim


def mlp_forward(x, prepped_ws, prepped_r, out_dim, *, block_b=None):
    """Run the fused MLP Pallas kernel.

    Args:
      x: (batch, input_dim) float array (kept f32; cast to bf16 inside the kernel).
      prepped_ws: list of (in_dim_l, out_dim_l) bf16 weights from prepare_mlp_params.
      prepped_r: (nn_dim, out_padded) bf16 readout (1/norm folded in, lane-padded).
      out_dim: logical output width (<= prepped_r.shape[1]).
      block_b: batch tile; default = full batch for small batches, otherwise
               split into >=2 tiles (multiple of 16) so v7x's 2 TCs share work.
    Returns:
      (batch, out_dim) float32
    """
    num_hidden = len(prepped_ws)
    batch, in_dim = x.shape
    out_padded = prepped_r.shape[1]

    if block_b is None:
        if batch > 256:
            # >=2 grid steps so dimension_semantics=("parallel",) can shard the
            # batch across v7x's 2 TensorCores; 16-row multiple = bf16 sublane pack.
            block_b = min(_round_up(pl.cdiv(batch, 2), 16), batch)
        else:
            block_b = batch
    grid = (pl.cdiv(batch, block_b),)

    in_specs = [pl.BlockSpec((block_b, in_dim), lambda i: (i, 0))]
    for w in prepped_ws:
        in_specs.append(pl.BlockSpec(w.shape, lambda i: (0, 0)))
    in_specs.append(pl.BlockSpec(prepped_r.shape, lambda i: (0, 0)))
    out_specs = pl.BlockSpec((block_b, out_padded), lambda i: (i, 0))

    # VMEM budget: every input is double-buffered by default. At toy sizes this
    # is tiny; when nn_dim scales up, raise the scoped limit (cap for v7x's
    # 64 MiB physical VMEM).  If weights still don't fit, switch their
    # BlockSpecs to pipeline_mode=pl.Buffered(1) (they're grid-invariant) or
    # add a K-reduction grid axis.
    weight_bytes = sum(int(w.size) * w.dtype.itemsize for w in prepped_ws)
    weight_bytes += int(prepped_r.size) * prepped_r.dtype.itemsize
    act_bytes = block_b * (in_dim * 4 + out_padded * 4)
    vmem_needed = 2 * (weight_bytes + act_bytes)
    vmem_limit = None
    if vmem_needed > (32 << 20):
        vmem_limit = min(_round_up(vmem_needed + (4 << 20), 1 << 20), 64 << 20)

    # Advisory cost estimate: this kernel is launch/DMA-latency bound at toy
    # sizes; give XLA an accurate (tiny) cost so it overlaps surrounding ops.
    flops = 0
    bytes_accessed = x.size * x.dtype.itemsize
    for w in prepped_ws:
        flops += 2 * batch * w.shape[0] * w.shape[1]
    flops += 2 * batch * prepped_r.shape[0] * prepped_r.shape[1]
    bytes_accessed += weight_bytes
    bytes_accessed += batch * out_padded * 4  # f32 output

    kernel = functools.partial(_mlp_kernel, num_hidden)

    y_padded = pl.pallas_call(
        kernel,
        out_shape=jax.ShapeDtypeStruct((batch, out_padded), jnp.float32),
        grid=grid,
        in_specs=in_specs,
        out_specs=out_specs,
        compiler_params=pltpu.CompilerParams(
            dimension_semantics=("parallel",),
            vmem_limit_bytes=vmem_limit),
        cost_estimate=pl.CostEstimate(
            flops=int(flops), transcendentals=0,
            bytes_accessed=int(bytes_accessed)),
    )(x, *prepped_ws, prepped_r)

    # Lazy slice back to the logical output width; ideally fused into the
    # consumer of y (the padded columns are exact zeros).
    return y_padded[:, :out_dim]


def mlp_reference_f32(x, hidden_weights, readout, norm):
    """Pure-JAX f32 reference matching the PyTorch module semantics exactly."""
    h = x
    for w in hidden_weights:
        h = (h @ w.T) / math.sqrt(h.shape[-1])
        h = jnp.maximum(h, 0.0)
    return (h @ readout) / norm


def mlp_reference_bf16(x, prepped_ws, prepped_r, out_dim):
    """bf16-matched reference (same prepped params / precision as the kernel)."""
    h = x.astype(jnp.bfloat16)
    for w in prepped_ws:
        z = jnp.dot(h, w, preferred_element_type=jnp.float32)
        h = jnp.maximum(z, 0.0).astype(jnp.bfloat16)
    y = jnp.dot(h, prepped_r, preferred_element_type=jnp.float32)
    return y[:, :out_dim]


if __name__ == "__main__":
    # Module hyperparameters (small, consistent with MLP.forward).
    batch = 8
    input_dim = 32
    nn_dim = 32
    out_dim = 8
    num_layers = 3
    norm_mode = "std"

    key = jax.random.PRNGKey(0)
    keys = jax.random.split(key, num_layers + 2)

    # Deterministic "randn"-style parameters (shapes per MLP.__init__).
    hidden_weights = [
        jax.random.normal(keys[0], (nn_dim, input_dim), dtype=jnp.float32)]
    for l in range(1, num_layers):
        hidden_weights.append(
            jax.random.normal(keys[l], (nn_dim, nn_dim), dtype=jnp.float32))
    readout = jax.random.normal(keys[num_layers], (nn_dim, out_dim),
                                dtype=jnp.float32)
    norm = nn_dim ** 0.5 if norm_mode == "std" else float(nn_dim)

    x = jax.random.normal(keys[num_layers + 1], (batch, input_dim),
                          dtype=jnp.float32)

    # One-time parameter prep: transpose, fold scales, lane-pad readout, cast bf16.
    prepped_ws, prepped_r, out_dim_logical = prepare_mlp_params(
        hidden_weights, readout, norm)

    y = mlp_forward(x, prepped_ws, prepped_r, out_dim_logical)
    y = jax.block_until_ready(y)

    # Check against a precision-matched bf16 reference (tight) and the exact
    # f32 PyTorch-semantics reference (loose, since the kernel uses bf16 MXU).
    y_bf16 = mlp_reference_bf16(x, prepped_ws, prepped_r, out_dim_logical)
    y_f32 = mlp_reference_f32(x, hidden_weights, readout, norm)

    assert y.shape == (batch, out_dim)
    assert jnp.allclose(y, y_bf16, atol=1e-2, rtol=1e-2), "mismatch vs bf16 reference"
    assert jnp.allclose(y, y_f32, atol=1e-1, rtol=1e-1), "mismatch vs f32 reference"

    print("KERNEL_OK")
</pallas_src>

<mosaic_0001>
module attributes {stable_mosaic.version = 11 : i64} {
  func.func @_mlp_kernel(%arg0: i32, %arg1: memref<8x32xf32, #tpu.memory_space<vmem>>, %arg2: memref<32x32xbf16, #tpu.memory_space<vmem>>, %arg3: memref<32x32xbf16, #tpu.memory_space<vmem>>, %arg4: memref<32x32xbf16, #tpu.memory_space<vmem>>, %arg5: memref<32x128xbf16, #tpu.memory_space<vmem>>, %arg6: memref<8x128xf32, #tpu.memory_space<vmem>>) attributes {dimension_semantics = [#tpu.dimension_semantics<parallel>], iteration_bounds = array<i64: 1>, scalar_prefetch = 0 : i64, scratch_operands = 0 : i64, tpu.core_type = #tpu.core_type<tc>, window_params = [{transform_indices = @transform_0, window_bounds = array<i64: 8, 32>}, {pipeline_mode = #tpu.pipeline_mode<synchronous>, transform_indices = @transform_1, window_bounds = array<i64: 32, 32>}, {pipeline_mode = #tpu.pipeline_mode<synchronous>, transform_indices = @transform_2, window_bounds = array<i64: 32, 32>}, {pipeline_mode = #tpu.pipeline_mode<synchronous>, transform_indices = @transform_3, window_bounds = array<i64: 32, 32>}, {pipeline_mode = #tpu.pipeline_mode<synchronous>, transform_indices = @transform_4, window_bounds = array<i64: 32, 128>}, {transform_indices = @transform_5, window_bounds = array<i64: 8, 128>}]} {
    %c0 = arith.constant 0 : index
    %c0_0 = arith.constant 0 : index
    %0 = vector.load %arg1[%c0, %c0_0] : memref<8x32xf32, #tpu.memory_space<vmem>>, vector<8x32xf32>
    %1 = arith.truncf %0 : vector<8x32xf32> to vector<8x32xbf16>
    %c0_1 = arith.constant 0 : index
    %c0_2 = arith.constant 0 : index
    %2 = vector.load %arg2[%c0_1, %c0_2] : memref<32x32xbf16, #tpu.memory_space<vmem>>, vector<32x32xbf16>
    %cst = arith.constant dense<0.000000e+00> : vector<8x32xf32>
    %3 = tpu.matmul %1, %2, %cst {dimension_numbers = #tpu.dot_dimension_numbers<[1], [0], [0], [1], [0, 0, 1, 1], [], []>} : vector<8x32xbf16>, vector<32x32xbf16>, vector<8x32xf32> -> vector<8x32xf32>
    %cst_3 = arith.constant 0.000000e+00 : f32
    %4 = vector.broadcast %cst_3 : f32 to vector<8x32xf32>
    %5 = arith.maximumf %3, %4 : vector<8x32xf32>
    %6 = arith.truncf %5 : vector<8x32xf32> to vector<8x32xbf16>
    %c0_4 = arith.constant 0 : index
    %c0_5 = arith.constant 0 : index
    %7 = vector.load %arg3[%c0_4, %c0_5] : memref<32x32xbf16, #tpu.memory_space<vmem>>, vector<32x32xbf16>
    %cst_6 = arith.constant dense<0.000000e+00> : vector<8x32xf32>
    %8 = tpu.matmul %6, %7, %cst_6 {dimension_numbers = #tpu.dot_dimension_numbers<[1], [0], [0], [1], [0, 0, 1, 1], [], []>} : vector<8x32xbf16>, vector<32x32xbf16>, vector<8x32xf32> -> vector<8x32xf32>
    %cst_7 = arith.constant 0.000000e+00 : f32
    %9 = vector.broadcast %cst_7 : f32 to vector<8x32xf32>
    %10 = arith.maximumf %8, %9 : vector<8x32xf32>
    %11 = arith.truncf %10 : vector<8x32xf32> to vector<8x32xbf16>
    %c0_8 = arith.constant 0 : index
    %c0_9 = arith.constant 0 : index
    %12 = vector.load %arg4[%c0_8, %c0_9] : memref<32x32xbf16, #tpu.memory_space<vmem>>, vector<32x32xbf16>
    %cst_10 = arith.constant dense<0.000000e+00> : vector<8x32xf32>
    %13 = tpu.matmul %11, %12, %cst_10 {dimension_numbers = #tpu.dot_dimension_numbers<[1], [0], [0], [1], [0, 0, 1, 1], [], []>} : vector<8x32xbf16>, vector<32x32xbf16>, vector<8x32xf32> -> vector<8x32xf32>
    %cst_11 = arith.constant 0.000000e+00 : f32
    %14 = vector.broadcast %cst_11 : f32 to vector<8x32xf32>
    %15 = arith.maximumf %13, %14 : vector<8x32xf32>
    %16 = arith.truncf %15 : vector<8x32xf32> to vector<8x32xbf16>
    %c0_12 = arith.constant 0 : index
    %c0_13 = arith.constant 0 : index
    %17 = vector.load %arg5[%c0_12, %c0_13] : memref<32x128xbf16, #tpu.memory_space<vmem>>, vector<32x128xbf16>
    %cst_14 = arith.constant dense<0.000000e+00> : vector<8x128xf32>
    %18 = tpu.matmul %16, %17, %cst_14 {dimension_numbers = #tpu.dot_dimension_numbers<[1], [0], [0], [1], [0, 0, 1, 1], [], []>} : vector<8x32xbf16>, vector<32x128xbf16>, vector<8x128xf32> -> vector<8x128xf32>
    %c0_15 = arith.constant 0 : index
    %c0_16 = arith.constant 0 : index
    %19 = vector.load %arg6[%c0_15, %c0_16] : memref<8x128xf32, #tpu.memory_space<vmem>>, vector<8x128xf32>
    tpu.vector_store %arg6[%c0_15, %c0_16], %18 {strides = array<i32>} : memref<8x128xf32, #tpu.memory_space<vmem>>, vector<8x128xf32>,
    return
  }
  func.func @transform_0(%arg0: i32) -> (i32, i32) {
    %c0_i32 = arith.constant 0 : i32
    %c0_i32_0 = arith.constant 0 : i32
    return %arg0, %c0_i32 : i32, i32
  }
  func.func @transform_1(%arg0: i32) -> (i32, i32) {
    %c0_i32 = arith.constant 0 : i32
    %c0_i32_0 = arith.constant 0 : i32
    %c0_i32_1 = arith.constant 0 : i32
    return %c0_i32, %c0_i32_0 : i32, i32
  }
  func.func @transform_2(%arg0: i32) -> (i32, i32) {
    %c0_i32 = arith.constant 0 : i32
    %c0_i32_0 = arith.constant 0 : i32
    %c0_i32_1 = arith.constant 0 : i32
    return %c0_i32, %c0_i32_0 : i32, i32
  }
  func.func @transform_3(%arg0: i32) -> (i32, i32) {
    %c0_i32 = arith.constant 0 : i32
    %c0_i32_0 = arith.constant 0 : i32
    %c0_i32_1 = arith.constant 0 : i32
    return %c0_i32, %c0_i32_0 : i32, i32
  }
  func.func @transform_4(%arg0: i32) -> (i32, i32) {
    %c0_i32 = arith.constant 0 : i32
    %c0_i32_0 = arith.constant 0 : i32
    %c0_i32_1 = arith.constant 0 : i32
    return %c0_i32, %c0_i32_0 : i32, i32
  }
  func.func @transform_5(%arg0: i32) -> (i32, i32) {
    %c0_i32 = arith.constant 0 : i32
    %c0_i32_0 = arith.constant 0 : i32
    return %arg0, %c0_i32 : i32, i32
  }
}

</mosaic_0001>

<llo_original>
// kernel: tpu_custom_call.1
$region0: #{tpu_custom_call.1}
  #allocation0 [shape = 'u32[]', space=smem, size = 0x4, offset = 0x4, fixed_abs, tag = 'smem constant byte address 0x4 - core index']
  #allocation1 [shape = 'u32[144,128]{1,0:T(1,128)}', space=vmem, size = 0x12000, scoped, tag = 'internal scratch']
  %s0 = inlined_call_operand.hbm [shape: f32[8,32], index: 0, kind: input, shape index: {}]
  %s1 = inlined_call_operand.hbm [shape: bf16[32,32], index: 1, kind: input, shape index: {}]
  %s2 = inlined_call_operand.hbm [shape: bf16[32,32], index: 2, kind: input, shape index: {}]
  %s3 = inlined_call_operand.hbm [shape: bf16[32,32], index: 3, kind: input, shape index: {}]
  %s4 = inlined_call_operand.hbm [shape: bf16[32,128], index: 4, kind: input, shape index: {}]
  %s5 = inlined_call_operand.hbm [shape: f32[8,128], index: 5, kind: output, shape index: {}]
  %s6 = sld [smem:[#allocation0]]
  $region50: #{tpu_custom_call.1} parent=0
    _
  %s8 = ssub.s32 1, %s6
  %s9 = scalar_select 0, %s8, %s6
  $region1: #{tpu_custom_call.1} parent=0
    #allocation2 [shape = 'u8[4096]{0}', space=vmem, size = 0x1000, scoped, tag = 'input window, operand 0, single buffered']
    #allocation3 [shape = 's32[1]{0}', space=sflag, size = 0x4, scoped, tag = 'scoped memory for tpu_custom_call.1']
    #allocation4 [shape = 's32[1]{0}', space=sflag, size = 0x4, scoped, tag = 'scoped memory for tpu_custom_call.1']
    #allocation5 [shape = 'u8[8192]{0}', space=vmem, size = 0x2000, scoped, tag = 'input window, operand 1, single buffered']
    #allocation6 [shape = 's32[1]{0}', space=sflag, size = 0x4, scoped, tag = 'scoped memory for tpu_custom_call.1']
    #allocation7 [shape = 'u8[8192]{0}', space=vmem, size = 0x2000, scoped, tag = 'input window, operand 2, single buffered']
    #allocation8 [shape = 'u8[8192]{0}', space=vmem, size = 0x2000, scoped, tag = 'input window, operand 3, single buffered']
    #allocation9 [shape = 's32[1]{0}', space=sflag, size = 0x4, scoped, tag = 'scoped memory for tpu_custom_call.1']
    #allocation10 [shape = 'u8[8192]{0}', space=vmem, size = 0x2000, scoped, tag = 'input window, operand 4, single buffered']
    #allocation11 [shape = 'u8[4096]{0}', space=vmem, size = 0x1000, scoped, tag = 'output window, operand 0, single buffered']
    %10 = vsyncpa [#allocation3], 0
    %11 = vsyncpa [#allocation6], 0
    %12 = vsyncpa [#allocation9], 0
    %13 = vsyncpa [#allocation4], 0
    // Predicated region
    $region2: #{tpu_custom_call.1} parent=1 // pred_check
      _
    $region3: #{tpu_custom_call.1} parent=1 // pred_check_branch
      %15 = sbr.rel (0) target = $region5
    $region4: #{tpu_custom_call.1} parent=1 // pred_region
      %s17 = ssub.s32 128, 128
      %18 = vsyncadd [#allocation3], %s17
      %s20 = sshll.u32 [#allocation2], 4
      %s21 = int_to_ptr.vmem [resolvable:$true] %s20
      %23 = dma.hbm_to_vmem [thread:$0]  %s0, 128, %s21, [#allocation3]
    $region5: #{tpu_custom_call.1} parent=1 // pred_fallthru
      _
    // Predicated region
    $region6: #{tpu_custom_call.1} parent=1 // pred_check
      _
    $region7: #{tpu_custom_call.1} parent=1 // pred_check_branch
      %25 = sbr.rel (0) target = $region9
    $region8: #{tpu_custom_call.1} parent=1 // pred_region
      %s27 = ssub.s32 256, 256
      %28 = vsyncadd [#allocation6], %s27
      %s29 = sshll.u32 [#allocation5], 4
      %s30 = int_to_ptr.vmem [resolvable:$true] %s29
      %35 = dma.hbm_to_vmem [thread:$0]  %s1, 256, %s30, [#allocation6], 64, 64, 4
    $region9: #{tpu_custom_call.1} parent=1 // pred_fallthru
      _
    // Predicated region
    $region10: #{tpu_custom_call.1} parent=1 // pred_check
      _
    $region11: #{tpu_custom_call.1} parent=1 // pred_check_branch
      %37 = sbr.rel (0) target = $region13
    $region12: #{tpu_custom_call.1} parent=1 // pred_region
      %s39 = ssub.s32 256, 256
      %40 = vsyncadd [#allocation6], %s39
      %s41 = sshll.u32 [#allocation7], 4
      %s42 = int_to_ptr.vmem [resolvable:$true] %s41
      %47 = dma.hbm_to_vmem [thread:$0]  %s2, 256, %s42, [#allocation6], 64, 64, 4
    $region13: #{tpu_custom_call.1} parent=1 // pred_fallthru
      _
    // Predicated region
    $region14: #{tpu_custom_call.1} parent=1 // pred_check
      _
    $region15: #{tpu_custom_call.1} parent=1 // pred_check_branch
      %49 = sbr.rel (0) target = $region17
    $region16: #{tpu_custom_call.1} parent=1 // pred_region
      %s51 = ssub.s32 256, 256
      %52 = vsyncadd [#allocation9], %s51
      %s53 = sshll.u32 [#allocation8], 4
      %s54 = int_to_ptr.vmem [resolvable:$true] %s53
      %59 = dma.hbm_to_vmem [thread:$0]  %s3, 256, %s54, [#allocation9], 64, 64, 4
    $region17: #{tpu_custom_call.1} parent=1 // pred_fallthru
      _
    // Predicated region
    $region18: #{tpu_custom_call.1} parent=1 // pred_check
      _
    $region19: #{tpu_custom_call.1} parent=1 // pred_check_branch
      %61 = sbr.rel (0) target = $region21
    $region20: #{tpu_custom_call.1} parent=1 // pred_region
      %s63 = ssub.s32 256, 256
      %64 = vsyncadd [#allocation9], %s63
      %s65 = sshll.u32 [#allocation10], 4
      %s66 = int_to_ptr.vmem [resolvable:$true] %s65
      %71 = dma.hbm_to_vmem [thread:$0]  %s4, 256, %s66, [#allocation9], 64, 64, 4
    $region21: #{tpu_custom_call.1} parent=1 // pred_fallthru
      _
    // Predicated region
    $region22: #{tpu_custom_call.1} parent=1 // pred_check
      _
    $region23: #{tpu_custom_call.1} parent=1 // pred_check_branch
      %73 = sbr.rel (0) target = $region25
    $region24: #{tpu_custom_call.1} parent=1 // pred_region
      %74 = dma.done [#allocation3], 128
    $region25: #{tpu_custom_call.1} parent=1 // pred_fallthru
      _
    // Predicated region
    $region26: #{tpu_custom_call.1} parent=1 // pred_check
      _
    $region27: #{tpu_custom_call.1} parent=1 // pred_check_branch
      %76 = sbr.rel (0) target = $region29
    $region28: #{tpu_custom_call.1} parent=1 // pred_region
      %77 = dma.done [#allocation6], 256
    $region29: #{tpu_custom_call.1} parent=1 // pred_fallthru
      _
    // Predicated region
    $region30: #{tpu_custom_call.1} parent=1 // pred_check
      _
    $region31: #{tpu_custom_call.1} parent=1 // pred_check_branch
      %79 = sbr.rel (0) target = $region33
    $region32: #{tpu_custom_call.1} parent=1 // pred_region
      %80 = dma.done [#allocation6], 256
    $region33: #{tpu_custom_call.1} parent=1 // pred_fallthru
      _
    // Predicated region
    $region34: #{tpu_custom_call.1} parent=1 // pred_check
      _
    $region35: #{tpu_custom_call.1} parent=1 // pred_check_branch
      %82 = sbr.rel (0) target = $region37
    $region36: #{tpu_custom_call.1} parent=1 // pred_region
      %83 = dma.done [#allocation9], 256
    $region37: #{tpu_custom_call.1} parent=1 // pred_fallthru
      _
    // Predicated region
    $region38: #{tpu_custom_call.1} parent=1 // pred_check
      _
    $region39: #{tpu_custom_call.1} parent=1 // pred_check_branch
      %85 = sbr.rel (0) target = $region41
    $region40: #{tpu_custom_call.1} parent=1 // pred_region
      %86 = dma.done [#allocation9], 256
    $region41: #{tpu_custom_call.1} parent=1 // pred_fallthru
      _
    %v88 = vld [vmem:[#allocation2] sm:$0xff]
    %v89 = vpack.c.bf16 %v88, %v88
    %v90 = vld [vmem:[#allocation5] sm:$0xf]
    %v91 = vld [vmem:[#allocation5 + $0x4] sm:$0xf]
    %v92 = vld [vmem:[#allocation5 + $0x8] sm:$0xf]
    %v93 = vld [vmem:[#allocation5 + $0xc] sm:$0xf]
    %v98 = vunpack.c.l.b16 %v90
    %v99 = vunpack.c.l.b16 %v91
    %v100 = vunpack.c.l.b16 %v92
    %v101 = vunpack.c.l.b16 %v93
    %v102 = vpack.c.b16 %v99, %v98
    %v103 = vpack.c.b16 %v101, %v100
    %vm106 = vcmask 261120
    %v108 = vsel %vm106, %v89, 0
    %110 = vmatprep.subr.bf16.mxu0 0
    %111 = vmatpush1.bf16.msra.mxu0 %v102
    %112 = vmatprep.subr.bf16.mxu0 0
    %113 = vmatpush1.bf16.msra.mxu0 %v103
    %114 = vmatprep.subr.bf16.mxu0 0
    %115 = vmatpush1.bf16.msra.mxu0 0
    %116 = vmatprep.subr.bf16.mxu0 0
    %117 = vmatpush1.bf16.msra.mxu0 0
    %118 = vmatprep.subr.bf16.mxu0 0
    %119 = vmatpush1.bf16.msra.mxu0 0
    %120 = vmatprep.subr.bf16.mxu0 0
    %121 = vmatpush1.bf16.msra.mxu0 0
    %122 = vmatprep.subr.bf16.mxu0 0
    %123 = vmatpush1.bf16.msra.mxu0 0
    %124 = vmatprep.subr.bf16.mxu0 0
    %125 = vmatpush1.bf16.msra.mxu0 0
    %126 = vmatprep.subr.bf16.mxu0 0
    %127 = vmatpush1.bf16.msra.mxu0 0
    %128 = vmatprep.subr.bf16.mxu0 0
    %129 = vmatpush1.bf16.msra.mxu0 0
    %130 = vmatprep.subr.bf16.mxu0 0
    %131 = vmatpush1.bf16.msra.mxu0 0
    %132 = vmatprep.subr.bf16.mxu0 0
    %133 = vmatpush1.bf16.msra.mxu0 0
    %134 = vmatprep.subr.bf16.mxu0 0
    %135 = vmatpush1.bf16.msra.mxu0 0
    %136 = vmatprep.subr.bf16.mxu0 0
    %137 = vmatpush1.bf16.msra.mxu0 0
    %138 = vmatprep.subr.bf16.mxu0 0
    %139 = vmatpush1.bf16.msra.mxu0 0
    %140 = vmatprep.subr.bf16.mxu0 0
    %141 = vmatpush1.bf16.msra.mxu0 0
    %142 = vmatprep.mubr.bf16.mxu0 0
    %143 = vmatmul.mubr.bf16.gmra.mrb[0].mxu0 %v108
    %v144 = vpop.f32.mrb[0].mxu0
    %v145 = vadd.f32 0.0, %v144
    %v146 = vpop.f32.mrb[0].mxu0
    %v147 = vpop.f32.mrb[0].mxu0
    %v148 = vpop.f32.mrb[0].mxu0
    %149 = vdwg.mxu0
    %v150 = vmax.f32 %v145, 0.0
    %v151 = vpack.c.bf16 %v150, %v150
    %v152 = vld [vmem:[#allocation7] sm:$0xf]
    %v153 = vld [vmem:[#allocation7 + $0x4] sm:$0xf]
    %v154 = vld [vmem:[#allocation7 + $0x8] sm:$0xf]
    %v155 = vld [vmem:[#allocation7 + $0xc] sm:$0xf]
    %v160 = vunpack.c.l.b16 %v152
    %v161 = vunpack.c.l.b16 %v153
    %v162 = vunpack.c.l.b16 %v154
    %v163 = vunpack.c.l.b16 %v155
    %v164 = vpack.c.b16 %v161, %v160
    %v165 = vpack.c.b16 %v163, %v162
    %v169 = vsel %vm106, %v151, 0
    %171 = vmatprep.subr.bf16.mxu0 0
    %172 = vmatpush1.bf16.msra.mxu0 %v164
    %173 = vmatprep.subr.bf16.mxu0 0
    %174 = vmatpush1.bf16.msra.mxu0 %v165
    %175 = vmatprep.subr.bf16.mxu0 0
    %176 = vmatpush1.bf16.msra.mxu0 0
    %177 = vmatprep.subr.bf16.mxu0 0
    %178 = vmatpush1.bf16.msra.mxu0 0
    %179 = vmatprep.subr.bf16.mxu0 0
    %180 = vmatpush1.bf16.msra.mxu0 0
    %181 = vmatprep.subr.bf16.mxu0 0
    %182 = vmatpush1.bf16.msra.mxu0 0
    %183 = vmatprep.subr.bf16.mxu0 0
    %184 = vmatpush1.bf16.msra.mxu0 0
    %185 = vmatprep.subr.bf16.mxu0 0
    %186 = vmatpush1.bf16.msra.mxu0 0
    %187 = vmatprep.subr.bf16.mxu0 0
    %188 = vmatpush1.bf16.msra.mxu0 0
    %189 = vmatprep.subr.bf16.mxu0 0
    %190 = vmatpush1.bf16.msra.mxu0 0
    %191 = vmatprep.subr.bf16.mxu0 0
    %192 = vmatpush1.bf16.msra.mxu0 0
    %193 = vmatprep.subr.bf16.mxu0 0
    %194 = vmatpush1.bf16.msra.mxu0 0
    %195 = vmatprep.subr.bf16.mxu0 0
    %196 = vmatpush1.bf16.msra.mxu0 0
    %197 = vmatprep.subr.bf16.mxu0 0
    %198 = vmatpush1.bf16.msra.mxu0 0
    %199 = vmatprep.subr.bf16.mxu0 0
    %200 = vmatpush1.bf16.msra.mxu0 0
    %201 = vmatprep.subr.bf16.mxu0 0
    %202 = vmatpush1.bf16.msra.mxu0 0
    %203 = vmatprep.mubr.bf16.mxu0 0
    %204 = vmatmul.mubr.bf16.gmra.mrb[0].mxu0 %v169
    %v205 = vpop.f32.mrb[0].mxu0
    %v206 = vadd.f32 0.0, %v205
    %v207 = vpop.f32.mrb[0].mxu0
    %v208 = vpop.f32.mrb[0].mxu0
    %v209 = vpop.f32.mrb[0].mxu0
    %210 = vdwg.mxu0
    %v211 = vmax.f32 %v206, 0.0
    %v212 = vpack.c.bf16 %v211, %v211
    %v213 = vld [vmem:[#allocation8] sm:$0xf]
    %v214 = vld [vmem:[#allocation8 + $0x4] sm:$0xf]
    %v215 = vld [vmem:[#allocation8 + $0x8] sm:$0xf]
    %v216 = vld [vmem:[#allocation8 + $0xc] sm:$0xf]
    %v221 = vunpack.c.l.b16 %v213
    %v222 = vunpack.c.l.b16 %v214
    %v223 = vunpack.c.l.b16 %v215
    %v224 = vunpack.c.l.b16 %v216
    %v225 = vpack.c.b16 %v222, %v221
    %v226 = vpack.c.b16 %v224, %v223
    %v230 = vsel %vm106, %v212, 0
    %232 = vmatprep.subr.bf16.mxu0 0
    %233 = vmatpush1.bf16.msra.mxu0 %v225
    %234 = vmatprep.subr.bf16.mxu0 0
    %235 = vmatpush1.bf16.msra.mxu0 %v226
    %236 = vmatprep.subr.bf16.mxu0 0
    %237 = vmatpush1.bf16.msra.mxu0 0
    %238 = vmatprep.subr.bf16.mxu0 0
    %239 = vmatpush1.bf16.msra.mxu0 0
    %240 = vmatprep.subr.bf16.mxu0 0
    %241 = vmatpush1.bf16.msra.mxu0 0
    %242 = vmatprep.subr.bf16.mxu0 0
    %243 = vmatpush1.bf16.msra.mxu0 0
    %244 = vmatprep.subr.bf16.mxu0 0
    %245 = vmatpush1.bf16.msra.mxu0 0
    %246 = vmatprep.subr.bf16.mxu0 0
    %247 = vmatpush1.bf16.msra.mxu0 0
    %248 = vmatprep.subr.bf16.mxu0 0
    %249 = vmatpush1.bf16.msra.mxu0 0
    %250 = vmatprep.subr.bf16.mxu0 0
    %251 = vmatpush1.bf16.msra.mxu0 0
    %252 = vmatprep.subr.bf16.mxu0 0
    %253 = vmatpush1.bf16.msra.mxu0 0
    %254 = vmatprep.subr.bf16.mxu0 0
    %255 = vmatpush1.bf16.msra.mxu0 0
    %256 = vmatprep.subr.bf16.mxu0 0
    %257 = vmatpush1.bf16.msra.mxu0 0
    %258 = vmatprep.subr.bf16.mxu0 0
    %259 = vmatpush1.bf16.msra.mxu0 0
    %260 = vmatprep.subr.bf16.mxu0 0
    %261 = vmatpush1.bf16.msra.mxu0 0
    %262 = vmatprep.subr.bf16.mxu0 0
    %263 = vmatpush1.bf16.msra.mxu0 0
    %264 = vmatprep.mubr.bf16.mxu0 0
    %265 = vmatmul.mubr.bf16.gmra.mrb[0].mxu0 %v230
    %v266 = vpop.f32.mrb[0].mxu0
    %v267 = vadd.f32 0.0, %v266
    %v268 = vpop.f32.mrb[0].mxu0
    %v269 = vpop.f32.mrb[0].mxu0
    %v270 = vpop.f32.mrb[0].mxu0
    %271 = vdwg.mxu0
    %v272 = vmax.f32 %v267, 0.0
    %v273 = vpack.c.bf16 %v272, %v272
    %v274 = vld [vmem:[#allocation10] sm:$0xf]
    %v275 = vld [vmem:[#allocation10 + $0x4] sm:$0xf]
    %v276 = vld [vmem:[#allocation10 + $0x8] sm:$0xf]
    %v277 = vld [vmem:[#allocation10 + $0xc] sm:$0xf]
    %v282 = vunpack.c.l.b16 %v274
    %v283 = vunpack.c.l.b16 %v275
    %v284 = vunpack.c.l.b16 %v276
    %v285 = vunpack.c.l.b16 %v277
    %v286 = vpack.c.b16 %v283, %v282
    %v287 = vpack.c.b16 %v285, %v284
    %v291 = vsel %vm106, %v273, 0
    %293 = vmatprep.subr.bf16.mxu0 0
    %294 = vmatpush1.bf16.msra.mxu0 %v286
    %295 = vmatprep.subr.bf16.mxu0 0
    %296 = vmatpush1.bf16.msra.mxu0 %v287
    %297 = vmatprep.subr.bf16.mxu0 0
    %298 = vmatpush1.bf16.msra.mxu0 0
    %299 = vmatprep.subr.bf16.mxu0 0
    %300 = vmatpush1.bf16.msra.mxu0 0
    %301 = vmatprep.subr.bf16.mxu0 0
    %302 = vmatpush1.bf16.msra.mxu0 0
    %303 = vmatprep.subr.bf16.mxu0 0
    %304 = vmatpush1.bf16.msra.mxu0 0
    %305 = vmatprep.subr.bf16.mxu0 0
    %306 = vmatpush1.bf16.msra.mxu0 0
    %307 = vmatprep.subr.bf16.mxu0 0
    %308 = vmatpush1.bf16.msra.mxu0 0
    %309 = vmatprep.subr.bf16.mxu0 0
    %310 = vmatpush1.bf16.msra.mxu0 0
    %311 = vmatprep.subr.bf16.mxu0 0
    %312 = vmatpush1.bf16.msra.mxu0 0
    %313 = vmatprep.subr.bf16.mxu0 0
    %314 = vmatpush1.bf16.msra.mxu0 0
    %315 = vmatprep.subr.bf16.mxu0 0
    %316 = vmatpush1.bf16.msra.mxu0 0
    %317 = vmatprep.subr.bf16.mxu0 0
    %318 = vmatpush1.bf16.msra.mxu0 0
    %319 = vmatprep.subr.bf16.mxu0 0
    %320 = vmatpush1.bf16.msra.mxu0 0
    %321 = vmatprep.subr.bf16.mxu0 0
    %322 = vmatpush1.bf16.msra.mxu0 0
    %323 = vmatprep.subr.bf16.mxu0 0
    %324 = vmatpush1.bf16.msra.mxu0 0
    %325 = vmatprep.mubr.bf16.mxu0 0
    %326 = vmatmul.mubr.bf16.gmra.mrb[0].mxu0 %v291
    %v327 = vpop.f32.mrb[0].mxu0
    %v328 = vadd.f32 0.0, %v327
    %v329 = vpop.f32.mrb[0].mxu0
    %v330 = vpop.f32.mrb[0].mxu0
    %v331 = vpop.f32.mrb[0].mxu0
    %332 = vdwg.mxu0
    %333 = vst [vmem:[#allocation11] sm:$0xff] %v328
    // Predicated region
    $region42: #{tpu_custom_call.1} parent=1 // pred_check
      _
    $region43: #{tpu_custom_call.1} parent=1 // pred_check_branch
      %335 = sbr.rel (0) target = $region45
    $region44: #{tpu_custom_call.1} parent=1 // pred_region
      %s337 = ssub.s32 128, 128
      %338 = vsyncadd [#allocation4], %s337
      %s340 = sshll.u32 [#allocation11], 4
      %s341 = int_to_ptr.vmem [resolvable:$true] %s340
      %343 = dma.vmem_to_hbm [thread:$0]  %s341, 128, %s5, [#allocation4]
    $region45: #{tpu_custom_call.1} parent=1 // pred_fallthru
      _
    // Predicated region
    $region46: #{tpu_custom_call.1} parent=1 // pred_check
      _
    $region47: #{tpu_custom_call.1} parent=1 // pred_check_branch
      %345 = sbr.rel (0) target = $region49
    $region48: #{tpu_custom_call.1} parent=1 // pred_region
      %346 = dma.done [#allocation4], 128
    $region49: #{tpu_custom_call.1} parent=1 // pred_fallthru
      _
    %347 = vsyncpa [#allocation3], 1
    %348 = vsyncpa [#allocation6], 1
    %349 = vsyncpa [#allocation9], 1
    %350 = vsyncpa [#allocation4], 1

</llo_original>
